<compile_context>
chip_gen: v7x
topology: tpu7x:2x2x1
jax: 0.10.0
libtpu: 0.0.40
codegen_flags: <defaults>
</compile_context>

<pallas_src>
import functools

import jax
import jax.numpy as jnp
from jax.experimental import pallas as pl
from jax.experimental.pallas import tpu as pltpu


def imu_kernel(x_ref, wc1_ref, sh1_ref, wc2_ref, sh2_ref,
               wf_ref, bf_ref, wo_ref, bo_ref,
               out_ref,
               h1_scr, h2_scr,
               *, L, TB, C2, dot_dtype):
    R1 = TB * L          # rows after conv1 (samples x time, flattened)
    R2 = R1 // 2         # rows after pool1
    R4 = R2 // 2         # rows after pool2
    L2 = L // 2          # time steps per sample after pool1
    L4 = L // 4          # time steps per sample after pool2
    f32 = jnp.float32

    # ---- conv1 (host im2col, BN scale folded into weights) + shift + ReLU ----
    h = jnp.dot(x_ref[...], wc1_ref[...], preferred_element_type=f32)   # (R1, 32)
    h = jnp.maximum(h + sh1_ref[...], 0.0)

    # ---- MaxPool1d(2): max(h[t], h[t+1]) in registers, keep even rows -------
    h = jnp.maximum(h, pltpu.roll(h, shift=R1 - 1, axis=0))
    h1_scr[...] = h
    h = h1_scr[pl.ds(0, R2, stride=2), :]                               # (R2, 32)

    # ---- conv2: three taps as one matmul + non-negative rolls + masks -------
    y3 = jnp.dot(h.astype(dot_dtype), wc2_ref[...],
                 preferred_element_type=f32)                            # (R2, 3*C2)
    left = y3[:, :C2]              # h[t] @ W0 -> needed at row t+1
    mid = y3[:, C2:2 * C2]         # h[t] @ W1 -> stays at row t
    right = y3[:, 2 * C2:]         # h[t] @ W2 -> needed at row t-1
    row = jax.lax.broadcasted_iota(jnp.int32, (R2, 1), 0)
    if L2 & (L2 - 1) == 0:
        t = row & (L2 - 1)         # power-of-two period: AND instead of mod
    else:
        t = row % L2
    h = mid
    h = h + jnp.where(t > 0, pltpu.roll(left, shift=1, axis=0), 0.0)
    h = h + jnp.where(t < L2 - 1, pltpu.roll(right, shift=R2 - 1, axis=0), 0.0)
    h = jnp.maximum(h + sh2_ref[...], 0.0)                              # (R2, 64)

    # ---- MaxPool1d(2) again --------------------------------------------------
    h = jnp.maximum(h, pltpu.roll(h, shift=R2 - 1, axis=0))
    h2_scr[...] = h
    h = h2_scr[pl.ds(0, R4, stride=2), :]                               # (R4, 64)

    # ---- AdaptiveAvgPool1d(1): segment-sum tree + one strided read -----------
    # sums[k][t] = sum of 2^k consecutive rows starting at t (circular; the
    # wrap never reaches the rows read below because sample k starts at k*L4).
    sums = [h]
    p = 1
    while p * 2 <= L4:
        prev = sums[-1]
        sums.append(prev + pltpu.roll(prev, shift=R4 - p, axis=0))
        p *= 2
    acc = None
    off = 0
    for k in reversed(range(len(sums))):
        p = 1 << k
        if L4 & p:
            s = sums[k]
            if off:
                s = pltpu.roll(s, shift=R4 - off, axis=0)
            acc = s if acc is None else acc + s
            off += p
    h2_scr[pl.ds(0, R4), :] = acc                     # reuse scratch for the read
    g = h2_scr[pl.ds(0, TB, stride=L4), :]            # (TB, 64) per-sample sums
    # 1/L4 is folded into wf on the host.

    # ---- FC -> ReLU -> Dropout (eval identity) -> output layer --------------
    f = jnp.maximum(
        jnp.dot(g.astype(dot_dtype), wf_ref[...],
                preferred_element_type=f32) + bf_ref[...], 0.0)         # (TB, 128)
    # TODO(synk): Dropout(0.5) is identity in eval mode; no training-mode RNG path.
    out_ref[...] = (
        jnp.dot(f.astype(dot_dtype), wo_ref[...],
                preferred_element_type=f32) + bo_ref[...])


def imu_convnet_forward(x, params, *, batch_block=None, use_bf16=False):
    (w1, b1, s1, t1, w2, b2, s2, t2, wf, bf, wo, bo) = params
    B, L, Cin = x.shape
    NC = wo.shape[1]
    if L % 4 != 0:
        # TODO(synk): PyTorch MaxPool1d(2) floors odd lengths; only L % 4 == 0 handled.
        raise ValueError("seq_len must be divisible by 4")
    L4 = L // 4

    # Batch block: bounded rows per grid step (tb*L <= ~4096 keeps the padded
    # input tile + scratches well under VMEM on v5e/v6e/v7x); for B >= 16 the
    # grid has at least 2 steps so the "parallel" axis can use both v7x TCs.
    if batch_block is None:
        rows_cap = 4096
        max_tb = max(8, (rows_cap // L) // 8 * 8) if L <= rows_cap else 8
        if B < 16:
            batch_block = min(B, max_tb)
        else:
            half = -(-B // 2)
            batch_block = max(8, min(((half + 7) // 8) * 8, max_tb))
    tb = batch_block
    nb = -(-B // tb)
    b_pad = nb * tb
    if b_pad != B:
        x = jnp.concatenate([x, jnp.zeros((b_pad - B, L, Cin), x.dtype)], axis=0)

    # f32 by default for exact parity; bf16 dot operands for v6e/v7x deployments.
    dot_dtype = jnp.bfloat16 if use_bf16 else jnp.float32

    # --- host-side folding (all free, one-time) -------------------------------
    # conv1 im2col input: [x[t-1] | x[t] | x[t+1]], zero at sample boundaries.
    xf = x.astype(jnp.float32)
    xm1 = jnp.pad(xf, ((0, 0), (1, 0), (0, 0)))[:, :L]     # x[t-1]
    xp1 = jnp.pad(xf, ((0, 0), (0, 1), (0, 0)))[:, 1:]     # x[t+1]
    x2 = jnp.concatenate([xm1, xf, xp1], axis=-1).reshape(b_pad * L, 3 * Cin)
    x2 = x2.astype(dot_dtype)
    # conv weights: BN scale folded in; conv bias folded into the BN shift.
    wc1_s = (jnp.concatenate([w1[0], w1[1], w1[2]], axis=0) * s1)        # (3*Cin, 32)
    wc1_s = wc1_s.astype(dot_dtype)
    sh1 = b1 * s1 + t1                                                   # (1, 32)
    wc2_s = jnp.concatenate([w2[0] * s2, w2[1] * s2, w2[2] * s2], axis=1)  # (32, 192)
    wc2_s = wc2_s.astype(dot_dtype)
    sh2 = b2 * s2 + t2                                                   # (1, 64)
    # GAP mean -> sum: fold 1/L4 into the FC weight.
    wf_s = (wf / L4).astype(dot_dtype)                                   # (64, 128)
    # Lane-dense classifier output (pad to >= 128 lanes; sliced back below).
    n_out = max(128, ((NC + 127) // 128) * 128)
    wo_p = jnp.zeros((wo.shape[0], n_out), jnp.float32).at[:, :NC].set(wo)
    wo_p = wo_p.astype(dot_dtype)
    bo_p = jnp.zeros((1, n_out), jnp.float32).at[:, :NC].set(bo)

    kernel = functools.partial(imu_kernel, L=L, TB=tb, C2=64, dot_dtype=dot_dtype)

    def full_spec(a):
        rank = a.ndim
        return pl.BlockSpec(a.shape, lambda i, _r=rank: (0,) * _r)

    esize = 2 if use_bf16 else 4
    flops = 2 * (b_pad * L * (3 * Cin) * 32
                 + (b_pad * L // 2) * 32 * 192
                 + b_pad * 64 * 128
                 + b_pad * 128 * n_out)
    bytes_accessed = (x2.size * esize + b_pad * n_out * 4
                      + (wc1_s.size + wc2_s.size + wf_s.size + wo_p.size) * esize
                      + (sh1.size + sh2.size + bf.size + bo_p.size) * 4)

    out = pl.pallas_call(
        kernel,
        out_shape=jax.ShapeDtypeStruct((b_pad, n_out), jnp.float32),
        grid=(nb,),
        in_specs=[
            pl.BlockSpec((tb * L, 3 * Cin), lambda i: (i, 0)),
            full_spec(wc1_s), full_spec(sh1),
            full_spec(wc2_s), full_spec(sh2),
            full_spec(wf_s), full_spec(bf), full_spec(wo_p), full_spec(bo_p),
        ],
        out_specs=pl.BlockSpec((tb, n_out), lambda i: (i, 0)),
        scratch_shapes=[
            pltpu.VMEM((tb * L, 32), jnp.float32),
            pltpu.VMEM((tb * L // 2, 64), jnp.float32),
        ],
        compiler_params=pltpu.CompilerParams(
            dimension_semantics=("parallel",),
            vmem_limit_bytes=32 * 1024 * 1024),
        cost_estimate=pl.CostEstimate(
            flops=int(flops), transcendentals=0,
            bytes_accessed=int(bytes_accessed)),
    )(x2, wc1_s, sh1, wc2_s, sh2, wf_s, bf, wo_p, bo_p)

    return out[:B, :NC]


def reference_forward(x, params):
    # Pure-JAX reference mirroring the PyTorch forward (eval mode).
    (w1, b1, s1, t1, w2, b2, s2, t2, wf, bf, wo, bo) = params

    def conv1d(h, w, b):
        # h: (B, L, Cin); w: (3, Cin, Cout), padding=1
        L = h.shape[1]
        hp = jnp.pad(h, ((0, 0), (1, 1), (0, 0)))
        y = sum(jnp.einsum("blc,cd->bld", hp[:, k:k + L], w[k]) for k in range(3))
        return y + b

    h = jnp.maximum(conv1d(x, w1, b1) * s1 + t1, 0.0)
    h = jnp.maximum(h[:, 0::2], h[:, 1::2])
    h = jnp.maximum(conv1d(h, w2, b2) * s2 + t2, 0.0)
    h = jnp.maximum(h[:, 0::2], h[:, 1::2])
    g = jnp.mean(h, axis=1)
    f = jnp.maximum(g @ wf + bf, 0.0)
    return f @ wo + bo


def make_params(key, feature_dim=2, num_classes=6):
    ks = jax.random.split(key, 16)
    eps = 1e-5

    def bn_fold(kg, kb, km, kv, c):
        gamma = 1.0 + 0.1 * jax.random.normal(kg, (1, c), jnp.float32)
        beta = 0.1 * jax.random.normal(kb, (1, c), jnp.float32)
        mean = 0.1 * jax.random.normal(km, (1, c), jnp.float32)
        var = jax.random.uniform(kv, (1, c), jnp.float32, 0.5, 1.5)
        scale = gamma / jnp.sqrt(var + eps)
        shift = beta - mean * scale
        return scale, shift

    w1 = 0.1 * jax.random.normal(ks[0], (3, feature_dim, 32), jnp.float32)
    b1 = 0.1 * jax.random.normal(ks[1], (1, 32), jnp.float32)
    s1, t1 = bn_fold(ks[2], ks[3], ks[4], ks[5], 32)
    w2 = 0.1 * jax.random.normal(ks[6], (3, 32, 64), jnp.float32)
    b2 = 0.1 * jax.random.normal(ks[7], (1, 64), jnp.float32)
    s2, t2 = bn_fold(ks[8], ks[9], ks[10], ks[11], 64)
    wf = 0.1 * jax.random.normal(ks[12], (64, 128), jnp.float32)
    bf = 0.1 * jax.random.normal(ks[13], (1, 128), jnp.float32)
    wo = 0.1 * jax.random.normal(ks[14], (128, num_classes), jnp.float32)
    bo = 0.1 * jax.random.normal(ks[15], (1, num_classes), jnp.float32)
    return (w1, b1, s1, t1, w2, b2, s2, t2, wf, bf, wo, bo)


if __name__ == "__main__":
    key = jax.random.PRNGKey(0)
    kx, kp = jax.random.split(key)

    batch, seq_len, feature_dim, num_classes = 2, 16, 2, 6
    x = jax.random.normal(kx, (batch, seq_len, feature_dim), jnp.float32)
    params = make_params(kp, feature_dim=feature_dim, num_classes=num_classes)

    out = imu_convnet_forward(x, params)
    out = jax.block_until_ready(out)

    ref = reference_forward(x, params)
    assert out.shape == (batch, num_classes)
    assert jnp.allclose(out, ref, atol=1e-3, rtol=1e-3), (out, ref)

    print("KERNEL_OK")
</pallas_src>

<mosaic_0001>
module attributes {stable_mosaic.version = 11 : i64} {
  func.func @imu_kernel(%arg0: i32, %arg1: memref<32x6xf32, #tpu.memory_space<vmem>>, %arg2: memref<6x32xf32, #tpu.memory_space<vmem>>, %arg3: memref<1x32xf32, #tpu.memory_space<vmem>>, %arg4: memref<32x192xf32, #tpu.memory_space<vmem>>, %arg5: memref<1x64xf32, #tpu.memory_space<vmem>>, %arg6: memref<64x128xf32, #tpu.memory_space<vmem>>, %arg7: memref<1x128xf32, #tpu.memory_space<vmem>>, %arg8: memref<128x128xf32, #tpu.memory_space<vmem>>, %arg9: memref<1x128xf32, #tpu.memory_space<vmem>>, %arg10: memref<2x128xf32, #tpu.memory_space<vmem>>, %arg11: memref<32x32xf32, #tpu.memory_space<vmem>>, %arg12: memref<16x64xf32, #tpu.memory_space<vmem>>) attributes {dimension_semantics = [#tpu.dimension_semantics<parallel>], iteration_bounds = array<i64: 1>, scalar_prefetch = 0 : i64, scratch_operands = 2 : i64, tpu.core_type = #tpu.core_type<tc>, window_params = [{transform_indices = @transform_0, window_bounds = array<i64: 32, 6>}, {pipeline_mode = #tpu.pipeline_mode<synchronous>, transform_indices = @transform_1, window_bounds = array<i64: 6, 32>}, {pipeline_mode = #tpu.pipeline_mode<synchronous>, transform_indices = @transform_2, window_bounds = array<i64: 1, 32>}, {pipeline_mode = #tpu.pipeline_mode<synchronous>, transform_indices = @transform_3, window_bounds = array<i64: 32, 192>}, {pipeline_mode = #tpu.pipeline_mode<synchronous>, transform_indices = @transform_4, window_bounds = array<i64: 1, 64>}, {pipeline_mode = #tpu.pipeline_mode<synchronous>, transform_indices = @transform_5, window_bounds = array<i64: 64, 128>}, {pipeline_mode = #tpu.pipeline_mode<synchronous>, transform_indices = @transform_6, window_bounds = array<i64: 1, 128>}, {pipeline_mode = #tpu.pipeline_mode<synchronous>, transform_indices = @transform_7, window_bounds = array<i64: 128, 128>}, {pipeline_mode = #tpu.pipeline_mode<synchronous>, transform_indices = @transform_8, window_bounds = array<i64: 1, 128>}, {transform_indices = @transform_9, window_bounds = array<i64: 2, 128>}]} {
    %c0 = arith.constant 0 : index
    %c0_0 = arith.constant 0 : index
    %0 = vector.load %arg1[%c0, %c0_0] : memref<32x6xf32, #tpu.memory_space<vmem>>, vector<32x6xf32>
    %c0_1 = arith.constant 0 : index
    %c0_2 = arith.constant 0 : index
    %1 = vector.load %arg2[%c0_1, %c0_2] : memref<6x32xf32, #tpu.memory_space<vmem>>, vector<6x32xf32>
    %cst = arith.constant dense<0.000000e+00> : vector<32x32xf32>
    %2 = tpu.matmul %0, %1, %cst {dimension_numbers = #tpu.dot_dimension_numbers<[1], [0], [0], [1], [0, 0, 1, 1], [], []>} : vector<32x6xf32>, vector<6x32xf32>, vector<32x32xf32> -> vector<32x32xf32>
    %c0_3 = arith.constant 0 : index
    %c0_4 = arith.constant 0 : index
    %3 = vector.load %arg3[%c0_3, %c0_4] : memref<1x32xf32, #tpu.memory_space<vmem>>, vector<1x32xf32>
    %4 = vector.broadcast %3 : vector<1x32xf32> to vector<32x32xf32>
    %5 = arith.addf %2, %4 : vector<32x32xf32>
    %cst_5 = arith.constant 0.000000e+00 : f32
    %6 = vector.broadcast %cst_5 : f32 to vector<32x32xf32>
    %7 = arith.maximumf %5, %6 : vector<32x32xf32>
    %c31_i32 = arith.constant 31 : i32
    %8 = tpu.dynamic_rotate %7 by %c31_i32 dim 0 : vector<32x32xf32>, i32 -> vector<32x32xf32>
    %9 = arith.maximumf %7, %8 : vector<32x32xf32>
    %c0_6 = arith.constant 0 : index
    %c0_7 = arith.constant 0 : index
    %10 = vector.load %arg11[%c0_6, %c0_7] : memref<32x32xf32, #tpu.memory_space<vmem>>, vector<32x32xf32>
    tpu.vector_store %arg11[%c0_6, %c0_7], %9 {strides = array<i32>} : memref<32x32xf32, #tpu.memory_space<vmem>>, vector<32x32xf32>,
    %c0_8 = arith.constant 0 : index
    %c0_9 = arith.constant 0 : index
    %11 = tpu.strided_load %arg11[%c0_8, %c0_9] {strides = array<i32: 2, 1>} : memref<32x32xf32, #tpu.memory_space<vmem>>, vector<16x32xf32>
    %c0_10 = arith.constant 0 : index
    %c0_11 = arith.constant 0 : index
    %12 = vector.load %arg4[%c0_10, %c0_11] : memref<32x192xf32, #tpu.memory_space<vmem>>, vector<32x192xf32>
    %cst_12 = arith.constant dense<0.000000e+00> : vector<16x192xf32>
    %13 = tpu.matmul %11, %12, %cst_12 {dimension_numbers = #tpu.dot_dimension_numbers<[1], [0], [0], [1], [0, 0, 1, 1], [], []>} : vector<16x32xf32>, vector<32x192xf32>, vector<16x192xf32> -> vector<16x192xf32>
    %14 = vector.extract_strided_slice %13 {offsets = [0, 0], sizes = [16, 64], strides = [1, 1]} : vector<16x192xf32> to vector<16x64xf32>
    %15 = vector.extract_strided_slice %13 {offsets = [0, 64], sizes = [16, 64], strides = [1, 1]} : vector<16x192xf32> to vector<16x64xf32>
    %16 = vector.extract_strided_slice %13 {offsets = [0, 128], sizes = [16, 64], strides = [1, 1]} : vector<16x192xf32> to vector<16x64xf32>
    %17 = tpu.iota {dimensions = array<i32: 0>} : vector<16x1xi32>
    %c7_i32 = arith.constant 7 : i32
    %18 = vector.broadcast %c7_i32 : i32 to vector<16x1xi32>
    %19 = arith.andi %17, %18 : vector<16x1xi32>
    %c0_i32 = arith.constant 0 : i32
    %20 = vector.broadcast %c0_i32 : i32 to vector<16x1xi32>
    %21 = arith.cmpi sgt, %19, %20 : vector<16x1xi32>
    %c1_i32 = arith.constant 1 : i32
    %22 = tpu.dynamic_rotate %14 by %c1_i32 dim 0 : vector<16x64xf32>, i32 -> vector<16x64xf32>
    %cst_13 = arith.constant 0.000000e+00 : f32
    %23 = vector.shape_cast %21 : vector<16x1xi1> to vector<16x1xi1>
    %24 = vector.broadcast %23 : vector<16x1xi1> to vector<16x64xi1>
    %25 = vector.broadcast %cst_13 : f32 to vector<16x64xf32>
    %26 = arith.select %24, %22, %25 : vector<16x64xi1>, vector<16x64xf32>
    %27 = arith.addf %15, %26 : vector<16x64xf32>
    %c7_i32_14 = arith.constant 7 : i32
    %28 = vector.broadcast %c7_i32_14 : i32 to vector<16x1xi32>
    %29 = arith.cmpi slt, %19, %28 : vector<16x1xi32>
    %c15_i32 = arith.constant 15 : i32
    %30 = tpu.dynamic_rotate %16 by %c15_i32 dim 0 : vector<16x64xf32>, i32 -> vector<16x64xf32>
    %cst_15 = arith.constant 0.000000e+00 : f32
    %31 = vector.shape_cast %29 : vector<16x1xi1> to vector<16x1xi1>
    %32 = vector.broadcast %31 : vector<16x1xi1> to vector<16x64xi1>
    %33 = vector.broadcast %cst_15 : f32 to vector<16x64xf32>
    %34 = arith.select %32, %30, %33 : vector<16x64xi1>, vector<16x64xf32>
    %35 = arith.addf %27, %34 : vector<16x64xf32>
    %c0_16 = arith.constant 0 : index
    %c0_17 = arith.constant 0 : index
    %36 = vector.load %arg5[%c0_16, %c0_17] : memref<1x64xf32, #tpu.memory_space<vmem>>, vector<1x64xf32>
    %37 = vector.broadcast %36 : vector<1x64xf32> to vector<16x64xf32>
    %38 = arith.addf %35, %37 : vector<16x64xf32>
    %cst_18 = arith.constant 0.000000e+00 : f32
    %39 = vector.broadcast %cst_18 : f32 to vector<16x64xf32>
    %40 = arith.maximumf %38, %39 : vector<16x64xf32>
    %c15_i32_19 = arith.constant 15 : i32
    %41 = tpu.dynamic_rotate %40 by %c15_i32_19 dim 0 : vector<16x64xf32>, i32 -> vector<16x64xf32>
    %42 = arith.maximumf %40, %41 : vector<16x64xf32>
    %c0_20 = arith.constant 0 : index
    %c0_21 = arith.constant 0 : index
    %43 = vector.load %arg12[%c0_20, %c0_21] : memref<16x64xf32, #tpu.memory_space<vmem>>, vector<16x64xf32>
    tpu.vector_store %arg12[%c0_20, %c0_21], %42 {strides = array<i32>} : memref<16x64xf32, #tpu.memory_space<vmem>>, vector<16x64xf32>,
    %c0_22 = arith.constant 0 : index
    %c0_23 = arith.constant 0 : index
    %44 = tpu.strided_load %arg12[%c0_22, %c0_23] {strides = array<i32: 2, 1>} : memref<16x64xf32, #tpu.memory_space<vmem>>, vector<8x64xf32>
    %c7_i32_24 = arith.constant 7 : i32
    %45 = tpu.dynamic_rotate %44 by %c7_i32_24 dim 0 : vector<8x64xf32>, i32 -> vector<8x64xf32>
    %46 = arith.addf %44, %45 : vector<8x64xf32>
    %c6_i32 = arith.constant 6 : i32
    %47 = tpu.dynamic_rotate %46 by %c6_i32 dim 0 : vector<8x64xf32>, i32 -> vector<8x64xf32>
    %48 = arith.addf %46, %47 : vector<8x64xf32>
    %c0_25 = arith.constant 0 : index
    %c0_26 = arith.constant 0 : index
    %49 = vector.load %arg12[%c0_25, %c0_26] : memref<16x64xf32, #tpu.memory_space<vmem>>, vector<8x64xf32>
    tpu.vector_store %arg12[%c0_25, %c0_26], %48 {strides = array<i32>} : memref<16x64xf32, #tpu.memory_space<vmem>>, vector<8x64xf32>,
    %c0_27 = arith.constant 0 : index
    %c0_28 = arith.constant 0 : index
    %50 = tpu.strided_load %arg12[%c0_27, %c0_28] {strides = array<i32: 4, 1>} : memref<16x64xf32, #tpu.memory_space<vmem>>, vector<2x64xf32>
    %c0_29 = arith.constant 0 : index
    %c0_30 = arith.constant 0 : index
    %51 = vector.load %arg6[%c0_29, %c0_30] : memref<64x128xf32, #tpu.memory_space<vmem>>, vector<64x128xf32>
    %cst_31 = arith.constant dense<0.000000e+00> : vector<2x128xf32>
    %52 = tpu.matmul %50, %51, %cst_31 {dimension_numbers = #tpu.dot_dimension_numbers<[1], [0], [0], [1], [0, 0, 1, 1], [], []>} : vector<2x64xf32>, vector<64x128xf32>, vector<2x128xf32> -> vector<2x128xf32>
    %c0_32 = arith.constant 0 : index
    %c0_33 = arith.constant 0 : index
    %53 = vector.load %arg7[%c0_32, %c0_33] : memref<1x128xf32, #tpu.memory_space<vmem>>, vector<1x128xf32>
    %54 = vector.broadcast %53 : vector<1x128xf32> to vector<2x128xf32>
    %55 = arith.addf %52, %54 : vector<2x128xf32>
    %cst_34 = arith.constant 0.000000e+00 : f32
    %56 = vector.broadcast %cst_34 : f32 to vector<2x128xf32>
    %57 = arith.maximumf %55, %56 : vector<2x128xf32>
    %c0_35 = arith.constant 0 : index
    %c0_36 = arith.constant 0 : index
    %58 = vector.load %arg8[%c0_35, %c0_36] : memref<128x128xf32, #tpu.memory_space<vmem>>, vector<128x128xf32>
    %cst_37 = arith.constant dense<0.000000e+00> : vector<2x128xf32>
    %59 = tpu.matmul %57, %58, %cst_37 {dimension_numbers = #tpu.dot_dimension_numbers<[1], [0], [0], [1], [0, 0, 1, 1], [], []>} : vector<2x128xf32>, vector<128x128xf32>, vector<2x128xf32> -> vector<2x128xf32>
    %c0_38 = arith.constant 0 : index
    %c0_39 = arith.constant 0 : index
    %60 = vector.load %arg9[%c0_38, %c0_39] : memref<1x128xf32, #tpu.memory_space<vmem>>, vector<1x128xf32>
    %61 = vector.broadcast %60 : vector<1x128xf32> to vector<2x128xf32>
    %62 = arith.addf %59, %61 : vector<2x128xf32>
    %c0_40 = arith.constant 0 : index
    %c0_41 = arith.constant 0 : index
    %63 = vector.load %arg10[%c0_40, %c0_41] : memref<2x128xf32, #tpu.memory_space<vmem>>, vector<2x128xf32>
    tpu.vector_store %arg10[%c0_40, %c0_41], %62 {strides = array<i32>} : memref<2x128xf32, #tpu.memory_space<vmem>>, vector<2x128xf32>,
    return
  }
  func.func @transform_0(%arg0: i32) -> (i32, i32) {
    %c0_i32 = arith.constant 0 : i32
    %c0_i32_0 = arith.constant 0 : i32
    return %arg0, %c0_i32 : i32, i32
  }
  func.func @transform_1(%arg0: i32) -> (i32, i32) {
    %c0_i32 = arith.constant 0 : i32
    %c0_i32_0 = arith.constant 0 : i32
    %c0_i32_1 = arith.constant 0 : i32
    return %c0_i32, %c0_i32_0 : i32, i32
  }
  func.func @transform_2(%arg0: i32) -> (i32, i32) {
    %c0_i32 = arith.constant 0 : i32
    %c0_i32_0 = arith.constant 0 : i32
    %c0_i32_1 = arith.constant 0 : i32
    return %c0_i32, %c0_i32_0 : i32, i32
  }
  func.func @transform_3(%arg0: i32) -> (i32, i32) {
    %c0_i32 = arith.constant 0 : i32
    %c0_i32_0 = arith.constant 0 : i32
    %c0_i32_1 = arith.constant 0 : i32
    return %c0_i32, %c0_i32_0 : i32, i32
  }
  func.func @transform_4(%arg0: i32) -> (i32, i32) {
    %c0_i32 = arith.constant 0 : i32
    %c0_i32_0 = arith.constant 0 : i32
    %c0_i32_1 = arith.constant 0 : i32
    return %c0_i32, %c0_i32_0 : i32, i32
  }
  func.func @transform_5(%arg0: i32) -> (i32, i32) {
    %c0_i32 = arith.constant 0 : i32
    %c0_i32_0 = arith.constant 0 : i32
    %c0_i32_1 = arith.constant 0 : i32
    return %c0_i32, %c0_i32_0 : i32, i32
  }
  func.func @transform_6(%arg0: i32) -> (i32, i32) {
    %c0_i32 = arith.constant 0 : i32
    %c0_i32_0 = arith.constant 0 : i32
    %c0_i32_1 = arith.constant 0 : i32
    return %c0_i32, %c0_i32_0 : i32, i32
  }
  func.func @transform_7(%arg0: i32) -> (i32, i32) {
    %c0_i32 = arith.constant 0 : i32
    %c0_i32_0 = arith.constant 0 : i32
    %c0_i32_1 = arith.constant 0 : i32
    return %c0_i32, %c0_i32_0 : i32, i32
  }
  func.func @transform_8(%arg0: i32) -> (i32, i32) {
    %c0_i32 = arith.constant 0 : i32
    %c0_i32_0 = arith.constant 0 : i32
    %c0_i32_1 = arith.constant 0 : i32
    return %c0_i32, %c0_i32_0 : i32, i32
  }
  func.func @transform_9(%arg0: i32) -> (i32, i32) {
    %c0_i32 = arith.constant 0 : i32
    %c0_i32_0 = arith.constant 0 : i32
    return %arg0, %c0_i32 : i32, i32
  }
}

</mosaic_0001>

<llo_original>
// kernel: tpu_custom_call.1
$region0: #{tpu_custom_call.1}
  #allocation0 [shape = 'u32[]', space=smem, size = 0x4, offset = 0x4, fixed_abs, tag = 'smem constant byte address 0x4 - core index']
  #allocation1 [shape = 'u32[144,128]{1,0:T(1,128)}', space=vmem, size = 0x12000, scoped, tag = 'internal scratch']
  #allocation2 [shape = 'f32[32,32]{1,0:T(8,128)}', space=vmem, size = 0x4000, scoped, tag = 'scratch operand']
  #allocation3 [shape = 'f32[16,64]{1,0:T(8,128)}', space=vmem, size = 0x2000, scoped, tag = 'scratch operand']
  %s0 = inlined_call_operand.vmem [shape: f32[32,6], index: 0, kind: input, shape index: {}]
  %s1 = inlined_call_operand.vmem [shape: f32[6,32], index: 1, kind: input, shape index: {}]
  %s2 = inlined_call_operand.vmem [shape: f32[1,32], index: 2, kind: input, shape index: {}]
  %s3 = inlined_call_operand.hbm [shape: f32[32,192], index: 3, kind: input, shape index: {}]
  %s4 = inlined_call_operand.vmem [shape: f32[1,64], index: 4, kind: input, shape index: {}]
  %s5 = inlined_call_operand.hbm [shape: f32[64,128], index: 5, kind: input, shape index: {}]
  %s6 = inlined_call_operand.vmem [shape: f32[1,128], index: 6, kind: input, shape index: {}]
  %s7 = inlined_call_operand.hbm [shape: f32[128,128], index: 7, kind: input, shape index: {}]
  %s8 = inlined_call_operand.vmem [shape: f32[1,128], index: 8, kind: input, shape index: {}]
  %s9 = inlined_call_operand.hbm [shape: f32[2,128], index: 9, kind: output, shape index: {}]
  %s10 = sld [smem:[#allocation0]]
  $region58: #{tpu_custom_call.1} parent=0
    _
  %s12 = ssub.s32 1, %s10
  %s13 = scalar_select 0, %s12, %s10
  $region1: #{tpu_custom_call.1} parent=0
    #allocation4 [shape = 'u8[32768]{0}', space=vmem, size = 0x8000, scoped, tag = 'input window, operand 3, single buffered']
    #allocation5 [shape = 's32[1]{0}', space=sflag, size = 0x4, scoped, tag = 'scoped memory for tpu_custom_call.1']
    #allocation6 [shape = 's32[1]{0}', space=sflag, size = 0x4, scoped, tag = 'scoped memory for tpu_custom_call.1']
    #allocation7 [shape = 'u8[32768]{0}', space=vmem, size = 0x8000, scoped, tag = 'input window, operand 5, single buffered']
    #allocation8 [shape = 's32[1]{0}', space=sflag, size = 0x4, scoped, tag = 'scoped memory for tpu_custom_call.1']
    #allocation9 [shape = 'u8[65536]{0}', space=vmem, size = 0x10000, scoped, tag = 'input window, operand 7, single buffered']
    #allocation10 [shape = 'u8[1024]{0}', space=vmem, size = 0x400, scoped, tag = 'output window, operand 0, single buffered']
    %14 = vsyncpa [#allocation5], 0
    %15 = vsyncpa [#allocation8], 0
    %16 = vsyncpa [#allocation6], 0
    // Predicated region
    $region2: #{tpu_custom_call.1} parent=1 // pred_check
      _
    $region3: #{tpu_custom_call.1} parent=1 // pred_check_branch
      %18 = sbr.rel (0) target = $region5
    $region4: #{tpu_custom_call.1} parent=1 // pred_region
      _
    $region5: #{tpu_custom_call.1} parent=1 // pred_fallthru
      _
    // Predicated region
    $region6: #{tpu_custom_call.1} parent=1 // pred_check
      _
    $region7: #{tpu_custom_call.1} parent=1 // pred_check_branch
      %20 = sbr.rel (0) target = $region9
    $region8: #{tpu_custom_call.1} parent=1 // pred_region
      _
    $region9: #{tpu_custom_call.1} parent=1 // pred_fallthru
      _
    // Predicated region
    $region10: #{tpu_custom_call.1} parent=1 // pred_check
      _
    $region11: #{tpu_custom_call.1} parent=1 // pred_check_branch
      %22 = sbr.rel (0) target = $region13
    $region12: #{tpu_custom_call.1} parent=1 // pred_region
      _
    $region13: #{tpu_custom_call.1} parent=1 // pred_fallthru
      _
    // Predicated region
    $region14: #{tpu_custom_call.1} parent=1 // pred_check
      _
    $region15: #{tpu_custom_call.1} parent=1 // pred_check_branch
      %24 = sbr.rel (0) target = $region17
    $region16: #{tpu_custom_call.1} parent=1 // pred_region
      %s26 = ssub.s32 1024, 1024
      %27 = vsyncadd [#allocation5], %s26
      %s28 = sshll.u32 [#allocation4], 4
      %s29 = int_to_ptr.vmem [resolvable:$true] %s28
      %34 = dma.hbm_to_vmem [thread:$0]  %s3, 1024, %s29, [#allocation5], 256, 256, 16
    $region17: #{tpu_custom_call.1} parent=1 // pred_fallthru
      _
    // Predicated region
    $region18: #{tpu_custom_call.1} parent=1 // pred_check
      _
    $region19: #{tpu_custom_call.1} parent=1 // pred_check_branch
      %36 = sbr.rel (0) target = $region21
    $region20: #{tpu_custom_call.1} parent=1 // pred_region
      _
    $region21: #{tpu_custom_call.1} parent=1 // pred_fallthru
      _
    // Predicated region
    $region22: #{tpu_custom_call.1} parent=1 // pred_check
      _
    $region23: #{tpu_custom_call.1} parent=1 // pred_check_branch
      %38 = sbr.rel (0) target = $region25
    $region24: #{tpu_custom_call.1} parent=1 // pred_region
      %s40 = ssub.s32 1024, 1024
      %41 = vsyncadd [#allocation8], %s40
      %s42 = sshll.u32 [#allocation7], 4
      %s43 = int_to_ptr.vmem [resolvable:$true] %s42
      %48 = dma.hbm_to_vmem [thread:$0]  %s5, 1024, %s43, [#allocation8], 128, 128, 8
    $region25: #{tpu_custom_call.1} parent=1 // pred_fallthru
      _
    // Predicated region
    $region26: #{tpu_custom_call.1} parent=1 // pred_check
      _
    $region27: #{tpu_custom_call.1} parent=1 // pred_check_branch
      %50 = sbr.rel (0) target = $region29
    $region28: #{tpu_custom_call.1} parent=1 // pred_region
      _
    $region29: #{tpu_custom_call.1} parent=1 // pred_fallthru
      _
    // Predicated region
    $region30: #{tpu_custom_call.1} parent=1 // pred_check
      _
    $region31: #{tpu_custom_call.1} parent=1 // pred_check_branch
      %52 = sbr.rel (0) target = $region33
    $region32: #{tpu_custom_call.1} parent=1 // pred_region
      %s54 = ssub.s32 2048, 2048
      %55 = vsyncadd [#allocation8], %s54
      %s56 = sshll.u32 [#allocation9], 4
      %s57 = int_to_ptr.vmem [resolvable:$true] %s56
      %62 = dma.hbm_to_vmem [thread:$0]  %s7, 2048, %s57, [#allocation8], 128, 128, 8
    $region33: #{tpu_custom_call.1} parent=1 // pred_fallthru
      _
    // Predicated region
    $region34: #{tpu_custom_call.1} parent=1 // pred_check
      _
    $region35: #{tpu_custom_call.1} parent=1 // pred_check_branch
      %64 = sbr.rel (0) target = $region37
    $region36: #{tpu_custom_call.1} parent=1 // pred_region
      _
    $region37: #{tpu_custom_call.1} parent=1 // pred_fallthru
      _
    // Predicated region
    $region38: #{tpu_custom_call.1} parent=1 // pred_check
      _
    $region39: #{tpu_custom_call.1} parent=1 // pred_check_branch
      %66 = sbr.rel (0) target = $region41
    $region40: #{tpu_custom_call.1} parent=1 // pred_region
      %67 = dma.done [#allocation5], 1024
    $region41: #{tpu_custom_call.1} parent=1 // pred_fallthru
      _
    // Predicated region
    $region42: #{tpu_custom_call.1} parent=1 // pred_check
      _
    $region43: #{tpu_custom_call.1} parent=1 // pred_check_branch
      %69 = sbr.rel (0) target = $region45
    $region44: #{tpu_custom_call.1} parent=1 // pred_region
      %70 = dma.done [#allocation8], 1024
    $region45: #{tpu_custom_call.1} parent=1 // pred_fallthru
      _
    // Predicated region
    $region46: #{tpu_custom_call.1} parent=1 // pred_check
      _
    $region47: #{tpu_custom_call.1} parent=1 // pred_check_branch
      %72 = sbr.rel (0) target = $region49
    $region48: #{tpu_custom_call.1} parent=1 // pred_region
      %73 = dma.done [#allocation8], 2048
    $region49: #{tpu_custom_call.1} parent=1 // pred_fallthru
      _
    %v74 = vld [vmem:[%s0] sm:$0xff]
    %v75 = vld [vmem:[%s0 + $0x8] sm:$0xff]
    %v76 = vld [vmem:[%s0 + $0x10] sm:$0xff]
    %v77 = vld [vmem:[%s0 + $0x18] sm:$0xff]
    %v78 = vld [vmem:[%s1] sm:$0x3f]
    %v79 = vld [vmem:[%s2] sm:$0x1]
    %v81 = vlaneseq
    %v82 = vshrl.u32 %v81, 7
    %v83 = vsub.s32 0, %v82
    %v84 = vrot.slane %v79, %v83
    %vm86 = vcmask 48128
    %v88 = vsel %vm86, %v74, 0
    %v91 = vsel %vm86, %v75, 0
    %v94 = vsel %vm86, %v76, 0
    %v97 = vsel %vm86, %v77, 0
    %vm99 = vcmask 1045504
    %v101 = vsel %vm99, %v78, 0
    %103 = vmatprep.subr.mxu0 0.0
    %104 = vmatpush1.msra.mxu0 %v101
    %105 = vmatprep.subr.mxu0 0.0
    %106 = vmatpush1.msra.mxu0 0.0
    %107 = vmatprep.subr.mxu0 0.0
    %108 = vmatpush1.msra.mxu0 0.0
    %109 = vmatprep.subr.mxu0 0.0
    %110 = vmatpush1.msra.mxu0 0.0
    %111 = vmatprep.subr.mxu0 0.0
    %112 = vmatpush1.msra.mxu0 0.0
    %113 = vmatprep.subr.mxu0 0.0
    %114 = vmatpush1.msra.mxu0 0.0
    %115 = vmatprep.subr.mxu0 0.0
    %116 = vmatpush1.msra.mxu0 0.0
    %117 = vmatprep.subr.mxu0 0.0
    %118 = vmatpush1.msra.mxu0 0.0
    %119 = vmatprep.subr.mxu0 0.0
    %120 = vmatpush1.msra.mxu0 0.0
    %121 = vmatprep.subr.mxu0 0.0
    %122 = vmatpush1.msra.mxu0 0.0
    %123 = vmatprep.subr.mxu0 0.0
    %124 = vmatpush1.msra.mxu0 0.0
    %125 = vmatprep.subr.mxu0 0.0
    %126 = vmatpush1.msra.mxu0 0.0
    %127 = vmatprep.subr.mxu0 0.0
    %128 = vmatpush1.msra.mxu0 0.0
    %129 = vmatprep.subr.mxu0 0.0
    %130 = vmatpush1.msra.mxu0 0.0
    %131 = vmatprep.subr.mxu0 0.0
    %132 = vmatpush1.msra.mxu0 0.0
    %133 = vmatprep.subr.mxu0 0.0
    %134 = vmatpush1.msra.mxu0 0.0
    %135 = vmatprep.subr.mxu0 0.0
    %136 = vmatpush1.msra.mxu0 0.0
    %137 = vmatprep.subr.mxu0 0.0
    %138 = vmatpush1.msra.mxu0 0.0
    %139 = vmatprep.subr.mxu0 0.0
    %140 = vmatpush1.msra.mxu0 0.0
    %141 = vmatprep.subr.mxu0 0.0
    %142 = vmatpush1.msra.mxu0 0.0
    %143 = vmatprep.subr.mxu0 0.0
    %144 = vmatpush1.msra.mxu0 0.0
    %145 = vmatprep.subr.mxu0 0.0
    %146 = vmatpush1.msra.mxu0 0.0
    %147 = vmatprep.subr.mxu0 0.0
    %148 = vmatpush1.msra.mxu0 0.0
    %149 = vmatprep.subr.mxu0 0.0
    %150 = vmatpush1.msra.mxu0 0.0
    %151 = vmatprep.subr.mxu0 0.0
    %152 = vmatpush1.msra.mxu0 0.0
    %153 = vmatprep.subr.mxu0 0.0
    %154 = vmatpush1.msra.mxu0 0.0
    %155 = vmatprep.subr.mxu0 0.0
    %156 = vmatpush1.msra.mxu0 0.0
    %157 = vmatprep.subr.mxu0 0.0
    %158 = vmatpush1.msra.mxu0 0.0
    %159 = vmatprep.subr.mxu0 0.0
    %160 = vmatpush1.msra.mxu0 0.0
    %161 = vmatprep.subr.mxu0 0.0
    %162 = vmatpush1.msra.mxu0 0.0
    %163 = vmatprep.subr.mxu0 0.0
    %164 = vmatpush1.msra.mxu0 0.0
    %165 = vmatprep.subr.mxu0 0.0
    %166 = vmatpush1.msra.mxu0 0.0
    %167 = vmatprep.mubr.f32.mxu0 0.0
    %168 = vmatmul.mubr.f32.gmra.mrb[0].mxu0 %v88
    %v169 = vpop.f32.mrb[0].mxu0
    %v170 = vadd.f32 %v84, %v169
    %v171 = vpop.f32.mrb[0].mxu0
    %172 = vmatprep.mubr.f32.mxu0 0.0
    %173 = vmatmul.mubr.f32.gmra.mrb[0].mxu0 %v91
    %v174 = vpop.f32.mrb[0].mxu0
    %v175 = vadd.f32 %v84, %v174
    %v176 = vpop.f32.mrb[0].mxu0
    %177 = vmatprep.mubr.f32.mxu0 0.0
    %178 = vmatmul.mubr.f32.gmra.mrb[0].mxu0 %v94
    %v179 = vpop.f32.mrb[0].mxu0
    %v180 = vadd.f32 %v84, %v179
    %v181 = vpop.f32.mrb[0].mxu0
    %182 = vmatprep.mubr.f32.mxu0 0.0
    %183 = vmatmul.mubr.f32.gmra.mrb[0].mxu0 %v97
    %v184 = vpop.f32.mrb[0].mxu0
    %v185 = vadd.f32 %v84, %v184
    %v186 = vpop.f32.mrb[0].mxu0
    %187 = vdwg.mxu0
    %v188 = vmax.f32 %v170, 0.0
    %v189 = vmax.f32 %v175, 0.0
    %v190 = vmax.f32 %v180, 0.0
    %v191 = vmax.f32 %v185, 0.0
    %v192 = vrot.slane %v188, 1
    %v193 = vrot.slane %v189, 1
    %v194 = vrot.slane %v190, 1
    %v195 = vrot.slane %v191, 1
    %v196 = vlaneseq
    %v197 = vshrl.u32 %v196, 7
    %vm198 = vcmp.lt.s32.totalorder %v197, 7
    %v199 = vsel %vm198, %v194, %v195
    %v200 = vsel %vm198, %v193, %v194
    %v201 = vsel %vm198, %v192, %v193
    %v202 = vsel %vm198, %v195, %v192
    %v203 = vmax.f32 %v188, %v201
    %v204 = vmax.f32 %v189, %v200
    %v205 = vmax.f32 %v190, %v199
    %v206 = vmax.f32 %v191, %v202
    %vm207 = vcmask 261120
    %208 = vst.msk [vmem:[#allocation2] sm:$0xff] %vm207, %v203
    %209 = vst.msk [vmem:[#allocation2 + $0x8] sm:$0xff] %vm207, %v204
    %210 = vst.msk [vmem:[#allocation2 + $0x10] sm:$0xff] %vm207, %v205
    %211 = vst.msk [vmem:[#allocation2 + $0x18] sm:$0xff] %vm207, %v206
    %v212 = vld [vmem:[#allocation2] ss:$2 sm:$0xff]
    %s213 = scalar_lea.vmem [#allocation2], 16
    %v214 = vld [vmem:[%s213] ss:$2 sm:$0xff]
    %v215 = vld [vmem:[#allocation4] sm:$0xff]
    %v216 = vld [vmem:[#allocation4 + $0x8] sm:$0xff]
    %v217 = vld [vmem:[#allocation4 + $0x10] sm:$0xff]
    %v218 = vld [vmem:[#allocation4 + $0x18] sm:$0xff]
    %v219 = vld [vmem:[#allocation4 + $0x20] sm:$0xff]
    %v220 = vld [vmem:[#allocation4 + $0x28] sm:$0xff]
    %v221 = vld [vmem:[#allocation4 + $0x30] sm:$0xff]
    %v222 = vld [vmem:[#allocation4 + $0x38] sm:$0xff]
    %v224 = vsel %vm207, %v212, 0
    %v227 = vsel %vm207, %v214, 0
    %229 = vmatprep.subr.mxu0 %v216
    %230 = vmatpush1.msra.mxu0 %v215
    %231 = vmatprep.subr.mxu0 %v218
    %232 = vmatpush1.msra.mxu0 %v217
    %233 = vmatprep.subr.mxu0 %v220
    %234 = vmatpush1.msra.mxu0 %v219
    %235 = vmatprep.subr.mxu0 %v222
    %236 = vmatpush1.msra.mxu0 %v221
    %237 = vmatprep.subr.mxu0 0.0
    %238 = vmatpush1.msra.mxu0 0.0
    %239 = vmatprep.subr.mxu0 0.0
    %240 = vmatpush1.msra.mxu0 0.0
    %241 = vmatprep.subr.mxu0 0.0
    %242 = vmatpush1.msra.mxu0 0.0
    %243 = vmatprep.subr.mxu0 0.0
    %244 = vmatpush1.msra.mxu0 0.0
    %245 = vmatprep.subr.mxu0 0.0
    %246 = vmatpush1.msra.mxu0 0.0
    %247 = vmatprep.subr.mxu0 0.0
    %248 = vmatpush1.msra.mxu0 0.0
    %249 = vmatprep.subr.mxu0 0.0
    %250 = vmatpush1.msra.mxu0 0.0
    %251 = vmatprep.subr.mxu0 0.0
    %252 = vmatpush1.msra.mxu0 0.0
    %253 = vmatprep.subr.mxu0 0.0
    %254 = vmatpush1.msra.mxu0 0.0
    %255 = vmatprep.subr.mxu0 0.0
    %256 = vmatpush1.msra.mxu0 0.0
    %257 = vmatprep.subr.mxu0 0.0
    %258 = vmatpush1.msra.mxu0 0.0
    %259 = vmatprep.subr.mxu0 0.0
    %260 = vmatpush1.msra.mxu0 0.0
    %261 = vmatprep.subr.mxu0 0.0
    %262 = vmatpush1.msra.mxu0 0.0
    %263 = vmatprep.subr.mxu0 0.0
    %264 = vmatpush1.msra.mxu0 0.0
    %265 = vmatprep.subr.mxu0 0.0
    %266 = vmatpush1.msra.mxu0 0.0
    %267 = vmatprep.subr.mxu0 0.0
    %268 = vmatpush1.msra.mxu0 0.0
    %269 = vmatprep.subr.mxu0 0.0
    %270 = vmatpush1.msra.mxu0 0.0
    %271 = vmatprep.subr.mxu0 0.0
    %272 = vmatpush1.msra.mxu0 0.0
    %273 = vmatprep.subr.mxu0 0.0
    %274 = vmatpush1.msra.mxu0 0.0
    %275 = vmatprep.subr.mxu0 0.0
    %276 = vmatpush1.msra.mxu0 0.0
    %277 = vmatprep.subr.mxu0 0.0
    %278 = vmatpush1.msra.mxu0 0.0
    %279 = vmatprep.subr.mxu0 0.0
    %280 = vmatpush1.msra.mxu0 0.0
    %281 = vmatprep.subr.mxu0 0.0
    %282 = vmatpush1.msra.mxu0 0.0
    %283 = vmatprep.subr.mxu0 0.0
    %284 = vmatpush1.msra.mxu0 0.0
    %285 = vmatprep.subr.mxu0 0.0
    %286 = vmatpush1.msra.mxu0 0.0
    %287 = vmatprep.subr.mxu0 0.0
    %288 = vmatpush1.msra.mxu0 0.0
    %289 = vmatprep.subr.mxu0 0.0
    %290 = vmatpush1.msra.mxu0 0.0
    %291 = vmatprep.subr.mxu0 0.0
    %292 = vmatpush1.msra.mxu0 0.0
    %293 = vmatprep.mubr.f32.mxu0 0.0
    %294 = vmatmul.mubr.f32.gmra.mrb[0].mxu0 %v224
    %v295 = vpop.f32.mrb[0].mxu0
    %v296 = vadd.f32 0.0, %v295
    %v297 = vpop.f32.mrb[0].mxu0
    %v298 = vadd.f32 0.0, %v297
    %299 = vmatprep.mubr.f32.mxu0 0.0
    %300 = vmatmul.mubr.f32.gmra.mrb[0].mxu0 %v227
    %v301 = vpop.f32.mrb[0].mxu0
    %v302 = vadd.f32 0.0, %v301
    %v303 = vpop.f32.mrb[0].mxu0
    %v304 = vadd.f32 0.0, %v303
    %305 = vdwg.mxu0
    %v306 = vadd.s32 %v197, 8
    %v307 = vand.u32 %v197, 7
    %v308 = vand.u32 %v306, 7
    %vm309 = vcmp.gt.s32.totalorder %v307, 0
    %vm310 = vcmp.gt.s32.totalorder %v308, 0
    %v311 = vrot.slane %v296, 7
    %v312 = vrot.slane %v302, 7
    %vm313 = vcmp.lt.s32.totalorder %v197, 1
    %v314 = vsel %vm313, %v311, %v312
    %v315 = vsel %vm313, %v312, %v311
    %v316 = vsel %vm309, 1, 0
    %v317 = vsel %vm310, 1, 0
    %vm318 = vcmp.eq.s32.totalorder %v316, 1
    %vm319 = vcmp.eq.s32.totalorder %v317, 1
    %v320 = vsel %vm318, %v315, 0.0
    %v321 = vsel %vm319, %v314, 0.0
    %324 = vrot.lane.b32.xlu0 %v320, 64
    %v325 = vpop.permute.xlu0 %324
    %326 = vrot.lane.b32.xlu0 %v321, 64
    %v327 = vpop.permute.xlu0 %326
    %v330 = vadd.f32 %v296, %v325
    %v331 = vadd.f32 %v302, %v327
    %vm332 = vcmp.lt.s32.totalorder %v307, 7
    %vm333 = vcmp.lt.s32.totalorder %v308, 7
    %v334 = vrot.slane %v298, 1
    %v335 = vrot.slane %v304, 1
    %v336 = vsel %vm198, %v334, %v335
    %v337 = vsel %vm198, %v335, %v334
    %v338 = vsel %vm332, 1, 0
    %v339 = vsel %vm333, 1, 0
    %vm340 = vcmp.eq.s32.totalorder %v338, 1
    %vm341 = vcmp.eq.s32.totalorder %v339, 1
    %v342 = vsel %vm340, %v336, 0.0
    %v343 = vsel %vm341, %v337, 0.0
    %346 = vrot.lane.b32.xlu0 %v342, 64
    %v347 = vpop.permute.xlu0 %346
    %348 = vrot.lane.b32.xlu0 %v343, 64
    %v349 = vpop.permute.xlu0 %348
    %v352 = vadd.f32 %v330, %v347
    %v353 = vadd.f32 %v331, %v349
    %v354 = vld [vmem:[%s4] sm:$0x1]
    %v356 = vlaneseq
    %v357 = vshrl.u32 %v356, 7
    %v358 = vsub.s32 0, %v357
    %v359 = vrot.slane %v354, %v358
    %360 = vrot.lane.b32.xlu0 %v359, 64
    %v361 = vpop.permute.xlu0 %360
    %v363 = vadd.f32 %v352, %v361
    %v364 = vadd.f32 %v353, %v361
    %v365 = vmax.f32 %v363, 0.0
    %v366 = vmax.f32 %v364, 0.0
    %369 = vrot.lane.b32.xlu0 %v365, 64
    %v370 = vpop.permute.xlu0 %369
    %371 = vrot.lane.b32.xlu0 %v366, 64
    %v372 = vpop.permute.xlu0 %371
    %v375 = vrot.slane %v370, 1
    %v376 = vrot.slane %v372, 1
    %v377 = vsel %vm198, %v375, %v376
    %v378 = vsel %vm198, %v376, %v375
    %381 = vrot.lane.b32.xlu0 %v377, 64
    %v382 = vpop.permute.xlu0 %381
    %383 = vrot.lane.b32.xlu0 %v378, 64
    %v384 = vpop.permute.xlu0 %383
    %v387 = vmax.f32 %v365, %v382
    %v388 = vmax.f32 %v366, %v384
    %391 = vrot.lane.b32.xlu0 %v387, 64
    %v392 = vpop.permute.xlu0 %391
    %393 = vrot.lane.b32.xlu0 %v388, 64
    %v394 = vpop.permute.xlu0 %393
    %vm397 = vcmask 523264
    %398 = vst.msk [vmem:[#allocation3] sm:$0xff] %vm397, %v392
    %399 = vst.msk [vmem:[#allocation3 + $0x8] sm:$0xff] %vm397, %v394
    %v400 = vld [vmem:[#allocation3] ss:$2 sm:$0xff]
    %v401 = vrot.slane %v400, 1
    %v402 = vadd.f32 %v400, %v401
    %v403 = vrot.slane %v402, 2
    %v404 = vadd.f32 %v402, %v403
    %405 = vst.msk [vmem:[#allocation3] sm:$0xff] %vm397, %v404
    %v406 = vld [vmem:[#allocation3] ss:$4 sm:$0x3]
    %v407 = vld [vmem:[#allocation7] sm:$0xff]
    %v408 = vld [vmem:[#allocation7 + $0x8] sm:$0xff]
    %v409 = vld [vmem:[#allocation7 + $0x10] sm:$0xff]
    %v410 = vld [vmem:[#allocation7 + $0x18] sm:$0xff]
    %v411 = vld [vmem:[#allocation7 + $0x20] sm:$0xff]
    %v412 = vld [vmem:[#allocation7 + $0x28] sm:$0xff]
    %v413 = vld [vmem:[#allocation7 + $0x30] sm:$0xff]
    %v414 = vld [vmem:[#allocation7 + $0x38] sm:$0xff]
    %v415 = vld [vmem:[%s6] sm:$0x1]
    %v417 = vlaneseq
    %v418 = vshrl.u32 %v417, 7
    %v419 = vsub.s32 0, %v418
    %v420 = vrot.slane %v415, %v419
    %v423 = vsel %vm397, %v406, 0
    %425 = vmatprep.subr.mxu0 0.0
    %426 = vmatpush1.msra.mxu0 %v407
    %427 = vmatprep.subr.mxu0 0.0
    %428 = vmatpush1.msra.mxu0 %v408
    %429 = vmatprep.subr.mxu0 0.0
    %430 = vmatpush1.msra.mxu0 %v409
    %431 = vmatprep.subr.mxu0 0.0
    %432 = vmatpush1.msra.mxu0 %v410
    %433 = vmatprep.subr.mxu0 0.0
    %434 = vmatpush1.msra.mxu0 %v411
    %435 = vmatprep.subr.mxu0 0.0
    %436 = vmatpush1.msra.mxu0 %v412
    %437 = vmatprep.subr.mxu0 0.0
    %438 = vmatpush1.msra.mxu0 %v413
    %439 = vmatprep.subr.mxu0 0.0
    %440 = vmatpush1.msra.mxu0 %v414
    %441 = vmatprep.subr.mxu0 0.0
    %442 = vmatpush1.msra.mxu0 0.0
    %443 = vmatprep.subr.mxu0 0.0
    %444 = vmatpush1.msra.mxu0 0.0
    %445 = vmatprep.subr.mxu0 0.0
    %446 = vmatpush1.msra.mxu0 0.0
    %447 = vmatprep.subr.mxu0 0.0
    %448 = vmatpush1.msra.mxu0 0.0
    %449 = vmatprep.subr.mxu0 0.0
    %450 = vmatpush1.msra.mxu0 0.0
    %451 = vmatprep.subr.mxu0 0.0
    %452 = vmatpush1.msra.mxu0 0.0
    %453 = vmatprep.subr.mxu0 0.0
    %454 = vmatpush1.msra.mxu0 0.0
    %455 = vmatprep.subr.mxu0 0.0
    %456 = vmatpush1.msra.mxu0 0.0
    %457 = vmatprep.subr.mxu0 0.0
    %458 = vmatpush1.msra.mxu0 0.0
    %459 = vmatprep.subr.mxu0 0.0
    %460 = vmatpush1.msra.mxu0 0.0
    %461 = vmatprep.subr.mxu0 0.0
    %462 = vmatpush1.msra.mxu0 0.0
    %463 = vmatprep.subr.mxu0 0.0
    %464 = vmatpush1.msra.mxu0 0.0
    %465 = vmatprep.subr.mxu0 0.0
    %466 = vmatpush1.msra.mxu0 0.0
    %467 = vmatprep.subr.mxu0 0.0
    %468 = vmatpush1.msra.mxu0 0.0
    %469 = vmatprep.subr.mxu0 0.0
    %470 = vmatpush1.msra.mxu0 0.0
    %471 = vmatprep.subr.mxu0 0.0
    %472 = vmatpush1.msra.mxu0 0.0
    %473 = vmatprep.subr.mxu0 0.0
    %474 = vmatpush1.msra.mxu0 0.0
    %475 = vmatprep.subr.mxu0 0.0
    %476 = vmatpush1.msra.mxu0 0.0
    %477 = vmatprep.subr.mxu0 0.0
    %478 = vmatpush1.msra.mxu0 0.0
    %479 = vmatprep.subr.mxu0 0.0
    %480 = vmatpush1.msra.mxu0 0.0
    %481 = vmatprep.subr.mxu0 0.0
    %482 = vmatpush1.msra.mxu0 0.0
    %483 = vmatprep.subr.mxu0 0.0
    %484 = vmatpush1.msra.mxu0 0.0
    %485 = vmatprep.subr.mxu0 0.0
    %486 = vmatpush1.msra.mxu0 0.0
    %487 = vmatprep.subr.mxu0 0.0
    %488 = vmatpush1.msra.mxu0 0.0
    %489 = vmatprep.mubr.f32.mxu0 0.0
    %490 = vmatmul.mubr.f32.gmra.mrb[0].mxu0 %v423
    %v491 = vpop.f32.mrb[0].mxu0
    %v492 = vadd.f32 %v420, %v491
    %v493 = vpop.f32.mrb[0].mxu0
    %494 = vdwg.mxu0
    %v495 = vmax.f32 %v492, 0.0
    %v496 = vld [vmem:[#allocation9] sm:$0xff]
    %v497 = vld [vmem:[#allocation9 + $0x8] sm:$0xff]
    %v498 = vld [vmem:[#allocation9 + $0x10] sm:$0xff]
    %v499 = vld [vmem:[#allocation9 + $0x18] sm:$0xff]
    %v500 = vld [vmem:[#allocation9 + $0x20] sm:$0xff]
    %v501 = vld [vmem:[#allocation9 + $0x28] sm:$0xff]
    %v502 = vld [vmem:[#allocation9 + $0x30] sm:$0xff]
    %v503 = vld [vmem:[#allocation9 + $0x38] sm:$0xff]
    %v504 = vld [vmem:[#allocation9 + $0x40] sm:$0xff]
    %v505 = vld [vmem:[#allocation9 + $0x48] sm:$0xff]
    %v506 = vld [vmem:[#allocation9 + $0x50] sm:$0xff]
    %v507 = vld [vmem:[#allocation9 + $0x58] sm:$0xff]
    %v508 = vld [vmem:[#allocation9 + $0x60] sm:$0xff]
    %v509 = vld [vmem:[#allocation9 + $0x68] sm:$0xff]
    %v510 = vld [vmem:[#allocation9 + $0x70] sm:$0xff]
    %v511 = vld [vmem:[#allocation9 + $0x78] sm:$0xff]
    %v512 = vld [vmem:[%s8] sm:$0x1]
    %v514 = vlaneseq
    %v515 = vshrl.u32 %v514, 7
    %v516 = vsub.s32 0, %v515
    %v517 = vrot.slane %v512, %v516
    %519 = vmatprep.subr.mxu0 0.0
    %520 = vmatpush1.msra.mxu0 %v496
    %521 = vmatprep.subr.mxu0 0.0
    %522 = vmatpush1.msra.mxu0 %v497
    %523 = vmatprep.subr.mxu0 0.0
    %524 = vmatpush1.msra.mxu0 %v498
    %525 = vmatprep.subr.mxu0 0.0
    %526 = vmatpush1.msra.mxu0 %v499
    %527 = vmatprep.subr.mxu0 0.0
    %528 = vmatpush1.msra.mxu0 %v500
    %529 = vmatprep.subr.mxu0 0.0
    %530 = vmatpush1.msra.mxu0 %v501
    %531 = vmatprep.subr.mxu0 0.0
    %532 = vmatpush1.msra.mxu0 %v502
    %533 = vmatprep.subr.mxu0 0.0
    %534 = vmatpush1.msra.mxu0 %v503
    %535 = vmatprep.subr.mxu0 0.0
    %536 = vmatpush1.msra.mxu0 %v504
    %537 = vmatprep.subr.mxu0 0.0
    %538 = vmatpush1.msra.mxu0 %v505
    %539 = vmatprep.subr.mxu0 0.0
    %540 = vmatpush1.msra.mxu0 %v506
    %541 = vmatprep.subr.mxu0 0.0
    %542 = vmatpush1.msra.mxu0 %v507
    %543 = vmatprep.subr.mxu0 0.0
    %544 = vmatpush1.msra.mxu0 %v508
    %545 = vmatprep.subr.mxu0 0.0
    %546 = vmatpush1.msra.mxu0 %v509
    %547 = vmatprep.subr.mxu0 0.0
    %548 = vmatpush1.msra.mxu0 %v510
    %549 = vmatprep.subr.mxu0 0.0
    %550 = vmatpush1.msra.mxu0 %v511
    %551 = vmatprep.subr.mxu0 0.0
    %552 = vmatpush1.msra.mxu0 0.0
    %553 = vmatprep.subr.mxu0 0.0
    %554 = vmatpush1.msra.mxu0 0.0
    %555 = vmatprep.subr.mxu0 0.0
    %556 = vmatpush1.msra.mxu0 0.0
    %557 = vmatprep.subr.mxu0 0.0
    %558 = vmatpush1.msra.mxu0 0.0
    %559 = vmatprep.subr.mxu0 0.0
    %560 = vmatpush1.msra.mxu0 0.0
    %561 = vmatprep.subr.mxu0 0.0
    %562 = vmatpush1.msra.mxu0 0.0
    %563 = vmatprep.subr.mxu0 0.0
    %564 = vmatpush1.msra.mxu0 0.0
    %565 = vmatprep.subr.mxu0 0.0
    %566 = vmatpush1.msra.mxu0 0.0
    %567 = vmatprep.subr.mxu0 0.0
    %568 = vmatpush1.msra.mxu0 0.0
    %569 = vmatprep.subr.mxu0 0.0
    %570 = vmatpush1.msra.mxu0 0.0
    %571 = vmatprep.subr.mxu0 0.0
    %572 = vmatpush1.msra.mxu0 0.0
    %573 = vmatprep.subr.mxu0 0.0
    %574 = vmatpush1.msra.mxu0 0.0
    %575 = vmatprep.subr.mxu0 0.0
    %576 = vmatpush1.msra.mxu0 0.0
    %577 = vmatprep.subr.mxu0 0.0
    %578 = vmatpush1.msra.mxu0 0.0
    %579 = vmatprep.subr.mxu0 0.0
    %580 = vmatpush1.msra.mxu0 0.0
    %581 = vmatprep.subr.mxu0 0.0
    %582 = vmatpush1.msra.mxu0 0.0
    %583 = vmatprep.mubr.f32.mxu0 0.0
    %584 = vmatmul.mubr.f32.gmra.mrb[0].mxu0 %v495
    %v585 = vpop.f32.mrb[0].mxu0
    %v586 = vadd.f32 %v517, %v585
    %v587 = vpop.f32.mrb[0].mxu0
    %588 = vdwg.mxu0
    %589 = vst [vmem:[#allocation10] sm:$0x3] %v586
    // Predicated region
    $region50: #{tpu_custom_call.1} parent=1 // pred_check
      _
    $region51: #{tpu_custom_call.1} parent=1 // pred_check_branch
      %591 = sbr.rel (0) target = $region53
    $region52: #{tpu_custom_call.1} parent=1 // pred_region
      %s593 = ssub.s32 32, 32
      %594 = vsyncadd [#allocation6], %s593
      %s596 = sshll.u32 [#allocation10], 4
      %s597 = int_to_ptr.vmem [resolvable:$true] %s596
      %599 = dma.vmem_to_hbm [thread:$0]  %s597, 32, %s9, [#allocation6]
    $region53: #{tpu_custom_call.1} parent=1 // pred_fallthru
      _
    // Predicated region
    $region54: #{tpu_custom_call.1} parent=1 // pred_check
      _
    $region55: #{tpu_custom_call.1} parent=1 // pred_check_branch
      %601 = sbr.rel (0) target = $region57
    $region56: #{tpu_custom_call.1} parent=1 // pred_region
      %602 = dma.done [#allocation6], 32
    $region57: #{tpu_custom_call.1} parent=1 // pred_fallthru
      _
    %603 = vsyncpa [#allocation5], 1
    %604 = vsyncpa [#allocation8], 1
    %605 = vsyncpa [#allocation6], 1

</llo_original>
